<compile_context>
chip_gen: v5e
topology: v5e:2x2
jax: 0.10.0
libtpu: 0.0.40
codegen_flags: <defaults>
</compile_context>

<pallas_src>
import numpy as np
import jax
import jax.numpy as jnp
from jax.experimental import pallas as pl
from jax.experimental.pallas import tpu as pltpu


# ----------------------------- Pallas kernel -------------------------------

def _convblock_kernel(x_ref, wa_ref, ba_ref, wb_ref, bb_ref, o_ref):
    # x_ref : (Nb, H, W*Cin)        bf16 lane-dense input slab (Nb images)
    # wa_ref: (3*W*Cin,  W*Cout)    bf16 block-Toeplitz conv-A weights (BN scale folded)
    # ba_ref: (1, W*Cout)           f32  conv-A folded bias, tiled across W
    # wb_ref: (3*W*Cout, W*Cout)    bf16 block-Toeplitz conv-B weights (BN scale folded)
    # bb_ref: (1, W*Cout)           f32  conv-B folded bias, tiled across W
    # o_ref : (Nb*H, W*Cout)        f32 lane-dense output slab
    xb = x_ref[...]                           # (Nb, H, W*Cin) bf16
    nb, h, _ = xb.shape

    def im2col_rows(a):
        # a: (nb, h, k) -> (nb*h, 3k): [row-1 | row | row+1] per image, zero row-padding.
        k = a.shape[2]
        z = jnp.zeros((nb, 1, k), a.dtype)
        up = jnp.concatenate([z, a[:, :h - 1, :]], axis=1)   # kh = 0 tap (input row r-1)
        dn = jnp.concatenate([a[:, 1:, :], z], axis=1)       # kh = 2 tap (input row r+1)
        cat = jnp.concatenate([up, a, dn], axis=2)            # (nb, h, 3k)
        return cat.reshape(nb * h, 3 * k)

    # ---- Conv A + folded BN + LeakyReLU: one bf16 MXU matmul, f32 accumulate ----
    ya = jnp.dot(im2col_rows(xb), wa_ref[...],
                 preferred_element_type=jnp.float32)          # (nb*h, W*Cout) f32
    ya = ya + ba_ref[...]                                     # BN scale folded into weights
    ya = jnp.where(ya >= 0, ya, 0.01 * ya)                    # LeakyReLU(0.01)
    # Dropout(p) in eval mode is the identity.

    # ---- Conv B + folded BN + LeakyReLU (intermediate stays on-chip) -----------
    yb_in = im2col_rows(ya.astype(jnp.bfloat16).reshape(nb, h, -1))
    yb = jnp.dot(yb_in, wb_ref[...], preferred_element_type=jnp.float32)
    yb = yb + bb_ref[...]
    yb = jnp.where(yb >= 0, yb, 0.01 * yb)
    o_ref[...] = yb.astype(o_ref.dtype)                       # unmasked full-lane store


# ------------------------------- JAX glue ----------------------------------

def _conv3x3_toeplitz(w, W):
    """w: (3, 3, Cin, Cout) -> (3, W*Cin, W*Cout) block-Toeplitz matrices.

    Row (H) padding is handled by the kernel's zero-filled shifted views; column (W)
    padding is folded into the Toeplitz structure (out-of-range taps omitted).
    """
    _, _, c_in, c_out = w.shape
    sel = np.zeros((3, W, W), np.float32)
    for kw in range(3):
        for wpos in range(W):
            j = wpos + kw - 1
            if 0 <= j < W:
                sel[kw, j, wpos] = 1.0
    sel = jnp.asarray(sel)
    # out[kh, j, c, wpos, o] = sum_kw sel[kw, j, wpos] * w[kh, kw, c, o]
    t = jnp.einsum("kjw,hkco->hjcwo", sel, w)
    return t.reshape(3, W * c_in, W * c_out)


def _fold_bn(conv_bias, gamma, beta, mean, var, eps=1e-5):
    scale = gamma / jnp.sqrt(var + eps)
    bias = beta + (conv_bias - mean) * scale
    return scale, bias


def convblock_forward(x_nchw, params, eps=1e-5):
    # NCHW (PyTorch) -> NHWC -> lane-dense (N, H, W*Cin) slab.
    x = jnp.transpose(x_nchw, (0, 2, 3, 1)).astype(jnp.float32)
    N, H, W, c_in = x.shape
    c_out = params["wa"].shape[-1]

    # Lane-dense / sublane-aligned assumptions (pad channels or width otherwise).
    assert (W * c_out) % 128 == 0, "W*Cout must be a multiple of 128 for unmasked stores"
    assert H % 8 == 0, "H must be a multiple of 8 (sublane tiling)"

    sa, ba = _fold_bn(params["ba"], params["gamma_a"], params["beta_a"],
                      params["mean_a"], params["var_a"], eps)
    sb, bb = _fold_bn(params["bb"], params["gamma_b"], params["beta_b"],
                      params["mean_b"], params["var_b"], eps)

    # BN scale folded into weights; kh taps concatenated along K; cast to bf16 for MXU.
    wa_t = _conv3x3_toeplitz(params["wa"] * sa[None, None, None, :], W)
    wb_t = _conv3x3_toeplitz(params["wb"] * sb[None, None, None, :], W)
    wa_cat = wa_t.reshape(3 * W * c_in, W * c_out).astype(jnp.bfloat16)
    wb_cat = wb_t.reshape(3 * W * c_out, W * c_out).astype(jnp.bfloat16)
    ba_slab = jnp.tile(ba, W)[None, :].astype(jnp.float32)    # (1, W*Cout)
    bb_slab = jnp.tile(bb, W)[None, :].astype(jnp.float32)

    x_slab = x.reshape(N, H, W * c_in).astype(jnp.bfloat16)

    # Block Nb images per grid step so the matmul M = Nb*H is reasonably large;
    # for the toy N=2 case the whole batch is a single grid step.
    nb = max(1, min(N, pl.cdiv(128, H)))
    while N % nb:
        nb -= 1
    grid = (N // nb,)

    out = pl.pallas_call(
        _convblock_kernel,
        out_shape=jax.ShapeDtypeStruct((N * H, W * c_out), jnp.float32),
        grid=grid,
        in_specs=[
            pl.BlockSpec((nb, H, W * c_in), lambda b: (b, 0, 0)),
            pl.BlockSpec((3 * W * c_in, W * c_out), lambda b: (0, 0)),
            pl.BlockSpec((1, W * c_out), lambda b: (0, 0)),
            pl.BlockSpec((3 * W * c_out, W * c_out), lambda b: (0, 0)),
            pl.BlockSpec((1, W * c_out), lambda b: (0, 0)),
        ],
        out_specs=pl.BlockSpec((nb * H, W * c_out), lambda b: (b, 0)),
        compiler_params=pltpu.CompilerParams(
            dimension_semantics=("parallel",),        # multi-step -> both TCs on v7x
            vmem_limit_bytes=32 * 1024 * 1024,
        ),
    )(x_slab, wa_cat, ba_slab, wb_cat, bb_slab)

    out = out.reshape(N, H, W, c_out)
    return jnp.transpose(out, (0, 3, 1, 2))       # back to NCHW


# ------------------------- reference (pure JAX) -----------------------------

def _convblock_reference(x_nchw, params, eps=1e-5):
    def block(x, w, b, gamma, beta, mean, var):
        y = jax.lax.conv_general_dilated(
            x, jnp.transpose(w, (3, 2, 0, 1)),          # (Cout, Cin, kh, kw)
            window_strides=(1, 1), padding=((1, 1), (1, 1)),
            dimension_numbers=("NCHW", "OIHW", "NCHW"))
        y = y + b[None, :, None, None]
        y = (gamma[None, :, None, None] * (y - mean[None, :, None, None])
             / jnp.sqrt(var[None, :, None, None] + eps)
             + beta[None, :, None, None])
        return jnp.where(y >= 0, y, 0.01 * y)

    y = block(x_nchw, params["wa"], params["ba"], params["gamma_a"],
              params["beta_a"], params["mean_a"], params["var_a"])
    y = block(y, params["wb"], params["bb"], params["gamma_b"],
              params["beta_b"], params["mean_b"], params["var_b"])
    return y


# --------------------------------- params -----------------------------------

def init_convblock_params(key, in_channels, out_channels):
    ks = jax.random.split(key, 8)
    return {
        # conv weights stored as (kh, kw, Cin, Cout)
        "wa": 0.1 * jax.random.normal(ks[0], (3, 3, in_channels, out_channels), jnp.float32),
        "ba": 0.1 * jax.random.normal(ks[1], (out_channels,), jnp.float32),
        "gamma_a": 1.0 + 0.1 * jax.random.normal(ks[2], (out_channels,), jnp.float32),
        "beta_a": 0.1 * jax.random.normal(ks[3], (out_channels,), jnp.float32),
        "mean_a": jnp.zeros((out_channels,), jnp.float32),   # PyTorch BN init running stats
        "var_a": jnp.ones((out_channels,), jnp.float32),
        "wb": 0.1 * jax.random.normal(ks[4], (3, 3, out_channels, out_channels), jnp.float32),
        "bb": 0.1 * jax.random.normal(ks[5], (out_channels,), jnp.float32),
        "gamma_b": 1.0 + 0.1 * jax.random.normal(ks[6], (out_channels,), jnp.float32),
        "beta_b": 0.1 * jax.random.normal(ks[7], (out_channels,), jnp.float32),
        "mean_b": jnp.zeros((out_channels,), jnp.float32),
        "var_b": jnp.ones((out_channels,), jnp.float32),
    }


# --------------------------------- main --------------------------------------

if __name__ == "__main__":
    key = jax.random.PRNGKey(0)
    k_x, k_p = jax.random.split(key)

    N = 2
    in_channels, out_channels = 4, 8
    H = W = 16                      # W * out_channels = 128 -> lane-dense output
    dropout_p = 0.1                 # eval mode: identity

    x = jax.random.normal(k_x, (N, in_channels, H, W), jnp.float32)   # NCHW
    params = init_convblock_params(k_p, in_channels, out_channels)

    out = convblock_forward(x, params)
    out = jax.block_until_ready(out)
    assert out.shape == (N, out_channels, H, W), out.shape

    ref = jax.block_until_ready(_convblock_reference(x, params))
    max_err = float(jnp.max(jnp.abs(out - ref)))
    # bf16 MXU operands (f32 accumulation): tolerance loosened vs. the f32 reference;
    # a structural bug (wrong tap / layout) would produce O(1) errors, far above this.
    assert max_err < 3e-2, f"max abs error {max_err}"

    print("KERNEL_OK")
</pallas_src>

<mosaic_0001>
module attributes {stable_mosaic.version = 11 : i64} {
  func.func @_convblock_kernel(%arg0: i32, %arg1: memref<2x16x64xbf16, #tpu.memory_space<vmem>>, %arg2: memref<192x128xbf16, #tpu.memory_space<vmem>>, %arg3: memref<1x128xf32, #tpu.memory_space<vmem>>, %arg4: memref<384x128xbf16, #tpu.memory_space<vmem>>, %arg5: memref<1x128xf32, #tpu.memory_space<vmem>>, %arg6: memref<32x128xf32, #tpu.memory_space<vmem>>) attributes {dimension_semantics = [#tpu.dimension_semantics<parallel>], iteration_bounds = array<i64: 1>, scalar_prefetch = 0 : i64, scratch_operands = 0 : i64, tpu.core_type = #tpu.core_type<tc>, window_params = [{transform_indices = @transform_0, window_bounds = array<i64: 2, 16, 64>}, {pipeline_mode = #tpu.pipeline_mode<synchronous>, transform_indices = @transform_1, window_bounds = array<i64: 192, 128>}, {pipeline_mode = #tpu.pipeline_mode<synchronous>, transform_indices = @transform_2, window_bounds = array<i64: 1, 128>}, {pipeline_mode = #tpu.pipeline_mode<synchronous>, transform_indices = @transform_3, window_bounds = array<i64: 384, 128>}, {pipeline_mode = #tpu.pipeline_mode<synchronous>, transform_indices = @transform_4, window_bounds = array<i64: 1, 128>}, {transform_indices = @transform_5, window_bounds = array<i64: 32, 128>}]} {
    %c0 = arith.constant 0 : index
    %c0_0 = arith.constant 0 : index
    %c0_1 = arith.constant 0 : index
    %0 = vector.load %arg1[%c0, %c0_0, %c0_1] : memref<2x16x64xbf16, #tpu.memory_space<vmem>>, vector<2x16x64xbf16>
    %cst = arith.constant 0.000000e+00 : bf16
    %1 = vector.broadcast %cst : bf16 to vector<2x1x64xbf16>
    %2 = vector.extract_strided_slice %0 {offsets = [0, 0, 0], sizes = [2, 15, 64], strides = [1, 1, 1]} : vector<2x16x64xbf16> to vector<2x15x64xbf16>
    %3 = tpu.concatenate %1, %2 in 1 : vector<2x1x64xbf16>, vector<2x15x64xbf16> -> vector<2x16x64xbf16>
    %4 = vector.extract_strided_slice %0 {offsets = [0, 1, 0], sizes = [2, 15, 64], strides = [1, 1, 1]} : vector<2x16x64xbf16> to vector<2x15x64xbf16>
    %5 = tpu.concatenate %4, %1 in 1 : vector<2x15x64xbf16>, vector<2x1x64xbf16> -> vector<2x16x64xbf16>
    %6 = tpu.concatenate %3, %0, %5 in 2 : vector<2x16x64xbf16>, vector<2x16x64xbf16>, vector<2x16x64xbf16> -> vector<2x16x192xbf16>
    %7 = vector.shape_cast %6 : vector<2x16x192xbf16> to vector<32x192xbf16>
    %c0_2 = arith.constant 0 : index
    %c0_3 = arith.constant 0 : index
    %8 = vector.load %arg2[%c0_2, %c0_3] : memref<192x128xbf16, #tpu.memory_space<vmem>>, vector<192x128xbf16>
    %cst_4 = arith.constant dense<0.000000e+00> : vector<32x128xf32>
    %9 = tpu.matmul %7, %8, %cst_4 {dimension_numbers = #tpu.dot_dimension_numbers<[1], [0], [0], [1], [0, 0, 1, 1], [], []>} : vector<32x192xbf16>, vector<192x128xbf16>, vector<32x128xf32> -> vector<32x128xf32>
    %c0_5 = arith.constant 0 : index
    %c0_6 = arith.constant 0 : index
    %10 = vector.load %arg3[%c0_5, %c0_6] : memref<1x128xf32, #tpu.memory_space<vmem>>, vector<1x128xf32>
    %11 = vector.broadcast %10 : vector<1x128xf32> to vector<32x128xf32>
    %12 = arith.addf %9, %11 : vector<32x128xf32>
    %cst_7 = arith.constant 0.000000e+00 : f32
    %13 = vector.broadcast %cst_7 : f32 to vector<32x128xf32>
    %14 = arith.cmpf oge, %12, %13 : vector<32x128xf32>
    %cst_8 = arith.constant 0.00999999977 : f32
    %15 = vector.broadcast %cst_8 : f32 to vector<32x128xf32>
    %16 = arith.mulf %15, %12 : vector<32x128xf32>
    %17 = arith.select %14, %12, %16 : vector<32x128xi1>, vector<32x128xf32>
    %18 = arith.truncf %17 : vector<32x128xf32> to vector<32x128xbf16>
    %19 = vector.shape_cast %18 : vector<32x128xbf16> to vector<2x16x128xbf16>
    %cst_9 = arith.constant 0.000000e+00 : bf16
    %20 = vector.broadcast %cst_9 : bf16 to vector<2x1x128xbf16>
    %21 = vector.extract_strided_slice %19 {offsets = [0, 0, 0], sizes = [2, 15, 128], strides = [1, 1, 1]} : vector<2x16x128xbf16> to vector<2x15x128xbf16>
    %22 = tpu.concatenate %20, %21 in 1 : vector<2x1x128xbf16>, vector<2x15x128xbf16> -> vector<2x16x128xbf16>
    %23 = vector.extract_strided_slice %19 {offsets = [0, 1, 0], sizes = [2, 15, 128], strides = [1, 1, 1]} : vector<2x16x128xbf16> to vector<2x15x128xbf16>
    %24 = tpu.concatenate %23, %20 in 1 : vector<2x15x128xbf16>, vector<2x1x128xbf16> -> vector<2x16x128xbf16>
    %25 = tpu.concatenate %22, %19, %24 in 2 : vector<2x16x128xbf16>, vector<2x16x128xbf16>, vector<2x16x128xbf16> -> vector<2x16x384xbf16>
    %26 = vector.shape_cast %25 : vector<2x16x384xbf16> to vector<32x384xbf16>
    %c0_10 = arith.constant 0 : index
    %c0_11 = arith.constant 0 : index
    %27 = vector.load %arg4[%c0_10, %c0_11] : memref<384x128xbf16, #tpu.memory_space<vmem>>, vector<384x128xbf16>
    %cst_12 = arith.constant dense<0.000000e+00> : vector<32x128xf32>
    %28 = tpu.matmul %26, %27, %cst_12 {dimension_numbers = #tpu.dot_dimension_numbers<[1], [0], [0], [1], [0, 0, 1, 1], [], []>} : vector<32x384xbf16>, vector<384x128xbf16>, vector<32x128xf32> -> vector<32x128xf32>
    %c0_13 = arith.constant 0 : index
    %c0_14 = arith.constant 0 : index
    %29 = vector.load %arg5[%c0_13, %c0_14] : memref<1x128xf32, #tpu.memory_space<vmem>>, vector<1x128xf32>
    %30 = vector.broadcast %29 : vector<1x128xf32> to vector<32x128xf32>
    %31 = arith.addf %28, %30 : vector<32x128xf32>
    %cst_15 = arith.constant 0.000000e+00 : f32
    %32 = vector.broadcast %cst_15 : f32 to vector<32x128xf32>
    %33 = arith.cmpf oge, %31, %32 : vector<32x128xf32>
    %cst_16 = arith.constant 0.00999999977 : f32
    %34 = vector.broadcast %cst_16 : f32 to vector<32x128xf32>
    %35 = arith.mulf %34, %31 : vector<32x128xf32>
    %36 = arith.select %33, %31, %35 : vector<32x128xi1>, vector<32x128xf32>
    %c0_17 = arith.constant 0 : index
    %c0_18 = arith.constant 0 : index
    %37 = vector.load %arg6[%c0_17, %c0_18] : memref<32x128xf32, #tpu.memory_space<vmem>>, vector<32x128xf32>
    tpu.vector_store %arg6[%c0_17, %c0_18], %36 {strides = array<i32>} : memref<32x128xf32, #tpu.memory_space<vmem>>, vector<32x128xf32>,
    return
  }
  func.func @transform_0(%arg0: i32) -> (i32, i32, i32) {
    %c0_i32 = arith.constant 0 : i32
    %c0_i32_0 = arith.constant 0 : i32
    %c0_i32_1 = arith.constant 0 : i32
    return %arg0, %c0_i32, %c0_i32_0 : i32, i32, i32
  }
  func.func @transform_1(%arg0: i32) -> (i32, i32) {
    %c0_i32 = arith.constant 0 : i32
    %c0_i32_0 = arith.constant 0 : i32
    %c0_i32_1 = arith.constant 0 : i32
    return %c0_i32, %c0_i32_0 : i32, i32
  }
  func.func @transform_2(%arg0: i32) -> (i32, i32) {
    %c0_i32 = arith.constant 0 : i32
    %c0_i32_0 = arith.constant 0 : i32
    %c0_i32_1 = arith.constant 0 : i32
    return %c0_i32, %c0_i32_0 : i32, i32
  }
  func.func @transform_3(%arg0: i32) -> (i32, i32) {
    %c0_i32 = arith.constant 0 : i32
    %c0_i32_0 = arith.constant 0 : i32
    %c0_i32_1 = arith.constant 0 : i32
    return %c0_i32, %c0_i32_0 : i32, i32
  }
  func.func @transform_4(%arg0: i32) -> (i32, i32) {
    %c0_i32 = arith.constant 0 : i32
    %c0_i32_0 = arith.constant 0 : i32
    %c0_i32_1 = arith.constant 0 : i32
    return %c0_i32, %c0_i32_0 : i32, i32
  }
  func.func @transform_5(%arg0: i32) -> (i32, i32) {
    %c0_i32 = arith.constant 0 : i32
    %c0_i32_0 = arith.constant 0 : i32
    return %arg0, %c0_i32 : i32, i32
  }
}

</mosaic_0001>

<llo_original>
// kernel: tpu_custom_call.1
$region0: #{tpu_custom_call.1}
  #allocation0 [shape = 'u32[]', space=smem, size = 0x4, offset = 0x4, fixed_abs, tag = 'smem constant byte address 0x4 - core index']
  #allocation1 [shape = 'u32[72,128]{1,0:T(1,128)}', space=vmem, size = 0x9000, scoped, tag = 'internal scratch']
  %s0 = inlined_call_operand.hbm [shape: bf16[2,16,64], index: 0, kind: input, shape index: {}]
  %s1 = inlined_call_operand.hbm [shape: bf16[192,128], index: 1, kind: input, shape index: {}]
  %s2 = inlined_call_operand.vmem [shape: f32[1,128], index: 2, kind: input, shape index: {}]
  %s3 = inlined_call_operand.hbm [shape: bf16[384,128], index: 3, kind: input, shape index: {}]
  %s4 = inlined_call_operand.vmem [shape: f32[1,128], index: 4, kind: input, shape index: {}]
  %s5 = inlined_call_operand.hbm [shape: f32[32,128], index: 5, kind: output, shape index: {}]
  %s6 = sld [smem:[#allocation0]]
  $region42: #{tpu_custom_call.1} parent=0
    _
  %s8 = ssub.s32 1, %s6
  %s9 = scalar_select 0, %s8, %s6
  $region1: #{tpu_custom_call.1} parent=0
    #allocation2 [shape = 'u8[8192]{0}', space=vmem, size = 0x2000, scoped, tag = 'input window, operand 0, single buffered']
    #allocation3 [shape = 's32[1]{0}', space=sflag, size = 0x4, scoped, tag = 'scoped memory for tpu_custom_call.1']
    #allocation4 [shape = 's32[1]{0}', space=sflag, size = 0x4, scoped, tag = 'scoped memory for tpu_custom_call.1']
    #allocation5 [shape = 'u8[49152]{0}', space=vmem, size = 0xc000, scoped, tag = 'input window, operand 1, single buffered']
    #allocation6 [shape = 's32[1]{0}', space=sflag, size = 0x4, scoped, tag = 'scoped memory for tpu_custom_call.1']
    #allocation7 [shape = 'u8[98304]{0}', space=vmem, size = 0x18000, scoped, tag = 'input window, operand 3, single buffered']
    #allocation8 [shape = 'u8[16384]{0}', space=vmem, size = 0x4000, scoped, tag = 'output window, operand 0, single buffered']
    %10 = vsyncpa [#allocation3], 0
    %11 = vsyncpa [#allocation6], 0
    %12 = vsyncpa [#allocation4], 0
    // Predicated region
    $region2: #{tpu_custom_call.1} parent=1 // pred_check
      _
    $region3: #{tpu_custom_call.1} parent=1 // pred_check_branch
      %14 = sbr.rel (0) target = $region5
    $region4: #{tpu_custom_call.1} parent=1 // pred_region
      %16 = vsyncadd [#allocation3], 0
      %s17 = sshll.u32 %s0, 4
      %s18 = int_to_ptr.hbm [resolvable:$true] %s17
      %s19 = sshll.u32 [#allocation2], 4
      %s20 = int_to_ptr.vmem [resolvable:$true] %s19
      %25 = dma.hbm_to_vmem [thread:$0]  %s18, 256, %s20, [#allocation3], 64, 64, 4
    $region5: #{tpu_custom_call.1} parent=1 // pred_fallthru
      _
    // Predicated region
    $region6: #{tpu_custom_call.1} parent=1 // pred_check
      _
    $region7: #{tpu_custom_call.1} parent=1 // pred_check_branch
      %27 = sbr.rel (0) target = $region9
    $region8: #{tpu_custom_call.1} parent=1 // pred_region
      %29 = vsyncadd [#allocation6], 0
      %s30 = sshll.u32 %s1, 4
      %s31 = int_to_ptr.hbm [resolvable:$true] %s30
      %s32 = sshll.u32 [#allocation5], 4
      %s33 = int_to_ptr.vmem [resolvable:$true] %s32
      %38 = dma.hbm_to_vmem [thread:$0]  %s31, 1536, %s33, [#allocation6], 64, 64, 4
    $region9: #{tpu_custom_call.1} parent=1 // pred_fallthru
      _
    // Predicated region
    $region10: #{tpu_custom_call.1} parent=1 // pred_check
      _
    $region11: #{tpu_custom_call.1} parent=1 // pred_check_branch
      %40 = sbr.rel (0) target = $region13
    $region12: #{tpu_custom_call.1} parent=1 // pred_region
      _
    $region13: #{tpu_custom_call.1} parent=1 // pred_fallthru
      _
    // Predicated region
    $region14: #{tpu_custom_call.1} parent=1 // pred_check
      _
    $region15: #{tpu_custom_call.1} parent=1 // pred_check_branch
      %42 = sbr.rel (0) target = $region17
    $region16: #{tpu_custom_call.1} parent=1 // pred_region
      %44 = vsyncadd [#allocation6], 0
      %s45 = sshll.u32 %s3, 4
      %s46 = int_to_ptr.hbm [resolvable:$true] %s45
      %s47 = sshll.u32 [#allocation7], 4
      %s48 = int_to_ptr.vmem [resolvable:$true] %s47
      %53 = dma.hbm_to_vmem [thread:$0]  %s46, 3072, %s48, [#allocation6], 64, 64, 4
    $region17: #{tpu_custom_call.1} parent=1 // pred_fallthru
      _
    // Predicated region
    $region18: #{tpu_custom_call.1} parent=1 // pred_check
      _
    $region19: #{tpu_custom_call.1} parent=1 // pred_check_branch
      %55 = sbr.rel (0) target = $region21
    $region20: #{tpu_custom_call.1} parent=1 // pred_region
      _
    $region21: #{tpu_custom_call.1} parent=1 // pred_fallthru
      _
    // Predicated region
    $region22: #{tpu_custom_call.1} parent=1 // pred_check
      _
    $region23: #{tpu_custom_call.1} parent=1 // pred_check_branch
      %57 = sbr.rel (0) target = $region25
    $region24: #{tpu_custom_call.1} parent=1 // pred_region
      %59 = dma.done [#allocation3], 256
    $region25: #{tpu_custom_call.1} parent=1 // pred_fallthru
      _
    // Predicated region
    $region26: #{tpu_custom_call.1} parent=1 // pred_check
      _
    $region27: #{tpu_custom_call.1} parent=1 // pred_check_branch
      %61 = sbr.rel (0) target = $region29
    $region28: #{tpu_custom_call.1} parent=1 // pred_region
      %63 = dma.done [#allocation6], 1536
    $region29: #{tpu_custom_call.1} parent=1 // pred_fallthru
      _
    // Predicated region
    $region30: #{tpu_custom_call.1} parent=1 // pred_check
      _
    $region31: #{tpu_custom_call.1} parent=1 // pred_check_branch
      %65 = sbr.rel (0) target = $region33
    $region32: #{tpu_custom_call.1} parent=1 // pred_region
      %67 = dma.done [#allocation6], 3072
    $region33: #{tpu_custom_call.1} parent=1 // pred_fallthru
      _
    %v69 = vld [vmem:[#allocation2] sm:$0xf]
    %v70 = vld [vmem:[#allocation2 + $0x4] sm:$0xf]
    %v71 = vld [vmem:[#allocation2 + $0x8] sm:$0xf]
    %v72 = vld [vmem:[#allocation2 + $0xc] sm:$0xf]
    %v77 = vunpack.c.l.b16 %v69
    %v78 = vunpack.c.l.b16 %v70
    %v79 = vunpack.c.l.b16 %v71
    %v80 = vunpack.c.l.b16 %v72
    %v81 = vpack.c.b16 %v78, %v77
    %v82 = vpack.c.b16 %v80, %v79
    %v84 = vshrl.u32 %v81, 16
    %v86 = vrot.slane %v84, 7
    %v87 = vshll.u32 %v81, 16
    %v89 = vor.u32 %v86, %v87
    %v91 = vshrl.u32 %v82, 16
    %v93 = vrot.slane %v91, 7
    %v94 = vshll.u32 %v82, 16
    %v96 = vor.u32 %v93, %v94
    %vm99 = vcmask 1040384
    %vm100 = vsmask.f32 256
    %vm101 = vmand %vm99, %vm100
    %v102 = vsel %vm101, 0, %v89
    %v103 = vsel %vm101, 0, %v96
    %v104 = vrot.slane %v87, 1
    %v105 = vor.u32 %v84, %v104
    %v106 = vrot.slane %v94, 1
    %v107 = vor.u32 %v91, %v106
    %vm110 = vcmask 1047552
    %vm111 = vsmask.f32 7424
    %vm112 = vmand %vm110, %vm111
    %v113 = vsel %vm112, %v105, 0
    %v114 = vsel %vm112, %v107, 0
    %115 = vrot.lane.b32.xlu0 %v81, 64
    %v116 = vpop.permute.xlu0 %115
    %117 = vrot.lane.b32.xlu0 %v82, 64
    %v118 = vpop.permute.xlu0 %117
    %vm119 = vcmask 523264
    %v122 = vsel %vm119, %v102, %v116
    %v126 = vsel %vm119, %v103, %v118
    %v128 = vld [vmem:[#allocation5] sm:$0xf]
    %v129 = vld [vmem:[#allocation5 + $0x4] sm:$0xf]
    %v130 = vld [vmem:[#allocation5 + $0x8] sm:$0xf]
    %v131 = vld [vmem:[#allocation5 + $0xc] sm:$0xf]
    %v132 = vld [vmem:[#allocation5 + $0x10] sm:$0xf]
    %v133 = vld [vmem:[#allocation5 + $0x14] sm:$0xf]
    %v134 = vld [vmem:[#allocation5 + $0x18] sm:$0xf]
    %v135 = vld [vmem:[#allocation5 + $0x1c] sm:$0xf]
    %v136 = vld [vmem:[#allocation5 + $0x20] sm:$0xf]
    %v137 = vld [vmem:[#allocation5 + $0x24] sm:$0xf]
    %v138 = vld [vmem:[#allocation5 + $0x28] sm:$0xf]
    %v139 = vld [vmem:[#allocation5 + $0x2c] sm:$0xf]
    %v140 = vld [vmem:[#allocation5 + $0x30] sm:$0xf]
    %v141 = vld [vmem:[#allocation5 + $0x34] sm:$0xf]
    %v142 = vld [vmem:[#allocation5 + $0x38] sm:$0xf]
    %v143 = vld [vmem:[#allocation5 + $0x3c] sm:$0xf]
    %v144 = vld [vmem:[#allocation5 + $0x40] sm:$0xf]
    %v145 = vld [vmem:[#allocation5 + $0x44] sm:$0xf]
    %v146 = vld [vmem:[#allocation5 + $0x48] sm:$0xf]
    %v147 = vld [vmem:[#allocation5 + $0x4c] sm:$0xf]
    %v148 = vld [vmem:[#allocation5 + $0x50] sm:$0xf]
    %v149 = vld [vmem:[#allocation5 + $0x54] sm:$0xf]
    %v150 = vld [vmem:[#allocation5 + $0x58] sm:$0xf]
    %v151 = vld [vmem:[#allocation5 + $0x5c] sm:$0xf]
    %v152 = vld [vmem:[%s2] sm:$0x1]
    %v154 = vperm.slane %v152, 0
    %v180 = vunpack.c.l.b16 %v128
    %v181 = vunpack.c.l.b16 %v129
    %v182 = vunpack.c.l.b16 %v130
    %v183 = vunpack.c.l.b16 %v131
    %v184 = vunpack.c.l.b16 %v132
    %v185 = vunpack.c.l.b16 %v133
    %v186 = vunpack.c.l.b16 %v134
    %v187 = vunpack.c.l.b16 %v135
    %v188 = vunpack.c.l.b16 %v136
    %v189 = vunpack.c.l.b16 %v137
    %v190 = vunpack.c.l.b16 %v138
    %v191 = vunpack.c.l.b16 %v139
    %v192 = vunpack.c.l.b16 %v140
    %v193 = vunpack.c.l.b16 %v141
    %v194 = vunpack.c.l.b16 %v142
    %v195 = vunpack.c.l.b16 %v143
    %v196 = vunpack.c.l.b16 %v144
    %v197 = vunpack.c.l.b16 %v145
    %v198 = vunpack.c.l.b16 %v146
    %v199 = vunpack.c.l.b16 %v147
    %v200 = vunpack.c.l.b16 %v148
    %v201 = vunpack.c.l.b16 %v149
    %v202 = vunpack.c.l.b16 %v150
    %v203 = vunpack.c.l.b16 %v151
    %v204 = vpack.c.b16 %v181, %v180
    %v205 = vpack.c.b16 %v183, %v182
    %v206 = vpack.c.b16 %v185, %v184
    %v207 = vpack.c.b16 %v187, %v186
    %v208 = vpack.c.b16 %v189, %v188
    %v209 = vpack.c.b16 %v191, %v190
    %v210 = vpack.c.b16 %v193, %v192
    %v211 = vpack.c.b16 %v195, %v194
    %v212 = vpack.c.b16 %v197, %v196
    %v213 = vpack.c.b16 %v199, %v198
    %v214 = vpack.c.b16 %v201, %v200
    %v215 = vpack.c.b16 %v203, %v202
    %v229 = vsel %vm119, %v113, 0
    %v232 = vsel %vm119, %v114, 0
    %234 = vmatpush.bf16.msra.mxu0 %v211
    %235 = vmatpush.bf16.msra.mxu0 %v210
    %236 = vmatpush.bf16.msra.mxu0 %v209
    %237 = vmatpush.bf16.msra.mxu0 %v208
    %238 = vmatpush.bf16.msra.mxu0 %v207
    %239 = vmatpush.bf16.msra.mxu0 %v206
    %240 = vmatpush.bf16.msra.mxu0 %v205
    %241 = vmatpush.bf16.msra.mxu0 %v204
    %242 = vmatmul.bf16.gmra.mxu0 %v122
    %v243 = vpop.f32.mrf.mxu0
    %v244 = vadd.f32 %v154, %v243
    %v245 = vpop.f32.mrf.mxu0
    %v246 = vadd.f32 %v154, %v245
    %247 = vmatmul.bf16.gmra.mxu0 %v126
    %v248 = vpop.f32.mrf.mxu0
    %v249 = vadd.f32 %v154, %v248
    %v250 = vpop.f32.mrf.mxu0
    %v251 = vadd.f32 %v154, %v250
    %252 = vdwg.mxu0
    %253 = vmatpush.bf16.msra.mxu0 0
    %254 = vmatpush.bf16.msra.mxu0 0
    %255 = vmatpush.bf16.msra.mxu0 0
    %256 = vmatpush.bf16.msra.mxu0 0
    %257 = vmatpush.bf16.msra.mxu0 %v215
    %258 = vmatpush.bf16.msra.mxu0 %v214
    %259 = vmatpush.bf16.msra.mxu0 %v213
    %260 = vmatpush.bf16.msra.mxu0 %v212
    %261 = vmatmul.bf16.gmra.mxu0 %v229
    %v262 = vpop.f32.mrf.mxu0
    %v263 = vadd.f32 %v244, %v262
    %v264 = vpop.f32.mrf.mxu0
    %v265 = vadd.f32 %v246, %v264
    %266 = vmatmul.bf16.gmra.mxu0 %v232
    %v267 = vpop.f32.mrf.mxu0
    %v268 = vadd.f32 %v249, %v267
    %v269 = vpop.f32.mrf.mxu0
    %v270 = vadd.f32 %v251, %v269
    %271 = vdwg.mxu0
    %vm272 = vcmp.ge.f32.partialorder %v263, 0.0
    %vm273 = vcmp.ge.f32.partialorder %v265, 0.0
    %vm274 = vcmp.ge.f32.partialorder %v268, 0.0
    %vm275 = vcmp.ge.f32.partialorder %v270, 0.0
    %v276 = vmul.f32 %v263, 0.01
    %v277 = vmul.f32 %v265, 0.01
    %v278 = vmul.f32 %v268, 0.01
    %v279 = vmul.f32 %v270, 0.01
    %v280 = vsel %vm272, %v263, %v276
    %v281 = vsel %vm273, %v265, %v277
    %v282 = vsel %vm274, %v268, %v278
    %v283 = vsel %vm275, %v270, %v279
    %v284 = vpack.c.bf16 %v280, %v280
    %v285 = vpack.c.bf16 %v281, %v281
    %v286 = vpack.c.bf16 %v282, %v282
    %v287 = vpack.c.bf16 %v283, %v283
    %v292 = vunpack.c.l.b16 %v284
    %v293 = vunpack.c.l.b16 %v285
    %v294 = vunpack.c.l.b16 %v286
    %v295 = vunpack.c.l.b16 %v287
    %v296 = vpack.c.b16 %v293, %v292
    %v297 = vpack.c.b16 %v295, %v294
    %v299 = vshrl.u32 %v296, 16
    %v301 = vrot.slane %v299, 7
    %v302 = vshll.u32 %v296, 16
    %v304 = vor.u32 %v301, %v302
    %v306 = vshrl.u32 %v297, 16
    %v308 = vrot.slane %v306, 7
    %v309 = vshll.u32 %v297, 16
    %v311 = vor.u32 %v308, %v309
    %v314 = vsel %vm101, 0, %v304
    %v315 = vsel %vm101, 0, %v311
    %v316 = vrot.slane %v302, 1
    %v317 = vor.u32 %v299, %v316
    %v318 = vrot.slane %v309, 1
    %v319 = vor.u32 %v306, %v318
    %v322 = vsel %vm112, %v317, 0
    %v323 = vsel %vm112, %v319, 0
    %v326 = vld [vmem:[#allocation7] sm:$0xf]
    %v327 = vld [vmem:[#allocation7 + $0x4] sm:$0xf]
    %v328 = vld [vmem:[#allocation7 + $0x8] sm:$0xf]
    %v329 = vld [vmem:[#allocation7 + $0xc] sm:$0xf]
    %v330 = vld [vmem:[#allocation7 + $0x10] sm:$0xf]
    %v331 = vld [vmem:[#allocation7 + $0x14] sm:$0xf]
    %v332 = vld [vmem:[#allocation7 + $0x18] sm:$0xf]
    %v333 = vld [vmem:[#allocation7 + $0x1c] sm:$0xf]
    %v334 = vld [vmem:[#allocation7 + $0x20] sm:$0xf]
    %v335 = vld [vmem:[#allocation7 + $0x24] sm:$0xf]
    %v336 = vld [vmem:[#allocation7 + $0x28] sm:$0xf]
    %v337 = vld [vmem:[#allocation7 + $0x2c] sm:$0xf]
    %v338 = vld [vmem:[#allocation7 + $0x30] sm:$0xf]
    %v339 = vld [vmem:[#allocation7 + $0x34] sm:$0xf]
    %v340 = vld [vmem:[#allocation7 + $0x38] sm:$0xf]
    %v341 = vld [vmem:[#allocation7 + $0x3c] sm:$0xf]
    %v342 = vld [vmem:[#allocation7 + $0x40] sm:$0xf]
    %v343 = vld [vmem:[#allocation7 + $0x44] sm:$0xf]
    %v344 = vld [vmem:[#allocation7 + $0x48] sm:$0xf]
    %v345 = vld [vmem:[#allocation7 + $0x4c] sm:$0xf]
    %v346 = vld [vmem:[#allocation7 + $0x50] sm:$0xf]
    %v347 = vld [vmem:[#allocation7 + $0x54] sm:$0xf]
    %v348 = vld [vmem:[#allocation7 + $0x58] sm:$0xf]
    %v349 = vld [vmem:[#allocation7 + $0x5c] sm:$0xf]
    %v350 = vld [vmem:[#allocation7 + $0x60] sm:$0xf]
    %v351 = vld [vmem:[#allocation7 + $0x64] sm:$0xf]
    %v352 = vld [vmem:[#allocation7 + $0x68] sm:$0xf]
    %v353 = vld [vmem:[#allocation7 + $0x6c] sm:$0xf]
    %v354 = vld [vmem:[#allocation7 + $0x70] sm:$0xf]
    %v355 = vld [vmem:[#allocation7 + $0x74] sm:$0xf]
    %v356 = vld [vmem:[#allocation7 + $0x78] sm:$0xf]
    %v357 = vld [vmem:[#allocation7 + $0x7c] sm:$0xf]
    %v358 = vld [vmem:[#allocation7 + $0x80] sm:$0xf]
    %v359 = vld [vmem:[#allocation7 + $0x84] sm:$0xf]
    %v360 = vld [vmem:[#allocation7 + $0x88] sm:$0xf]
    %v361 = vld [vmem:[#allocation7 + $0x8c] sm:$0xf]
    %v362 = vld [vmem:[#allocation7 + $0x90] sm:$0xf]
    %v363 = vld [vmem:[#allocation7 + $0x94] sm:$0xf]
    %v364 = vld [vmem:[#allocation7 + $0x98] sm:$0xf]
    %v365 = vld [vmem:[#allocation7 + $0x9c] sm:$0xf]
    %v366 = vld [vmem:[#allocation7 + $0xa0] sm:$0xf]
    %v367 = vld [vmem:[#allocation7 + $0xa4] sm:$0xf]
    %v368 = vld [vmem:[#allocation7 + $0xa8] sm:$0xf]
    %v369 = vld [vmem:[#allocation7 + $0xac] sm:$0xf]
    %v370 = vld [vmem:[#allocation7 + $0xb0] sm:$0xf]
    %v371 = vld [vmem:[#allocation7 + $0xb4] sm:$0xf]
    %v372 = vld [vmem:[#allocation7 + $0xb8] sm:$0xf]
    %v373 = vld [vmem:[#allocation7 + $0xbc] sm:$0xf]
    %v374 = vld [vmem:[%s4] sm:$0x1]
    %v376 = vperm.slane %v374, 0
    %v426 = vunpack.c.l.b16 %v326
    %v427 = vunpack.c.l.b16 %v327
    %v428 = vunpack.c.l.b16 %v328
    %v429 = vunpack.c.l.b16 %v329
    %v430 = vunpack.c.l.b16 %v330
    %v431 = vunpack.c.l.b16 %v331
    %v432 = vunpack.c.l.b16 %v332
    %v433 = vunpack.c.l.b16 %v333
    %v434 = vunpack.c.l.b16 %v334
    %v435 = vunpack.c.l.b16 %v335
    %v436 = vunpack.c.l.b16 %v336
    %v437 = vunpack.c.l.b16 %v337
    %v438 = vunpack.c.l.b16 %v338
    %v439 = vunpack.c.l.b16 %v339
    %v440 = vunpack.c.l.b16 %v340
    %v441 = vunpack.c.l.b16 %v341
    %v442 = vunpack.c.l.b16 %v342
    %v443 = vunpack.c.l.b16 %v343
    %v444 = vunpack.c.l.b16 %v344
    %v445 = vunpack.c.l.b16 %v345
    %v446 = vunpack.c.l.b16 %v346
    %v447 = vunpack.c.l.b16 %v347
    %v448 = vunpack.c.l.b16 %v348
    %v449 = vunpack.c.l.b16 %v349
    %v450 = vunpack.c.l.b16 %v350
    %v451 = vunpack.c.l.b16 %v351
    %v452 = vunpack.c.l.b16 %v352
    %v453 = vunpack.c.l.b16 %v353
    %v454 = vunpack.c.l.b16 %v354
    %v455 = vunpack.c.l.b16 %v355
    %v456 = vunpack.c.l.b16 %v356
    %v457 = vunpack.c.l.b16 %v357
    %v458 = vunpack.c.l.b16 %v358
    %v459 = vunpack.c.l.b16 %v359
    %v460 = vunpack.c.l.b16 %v360
    %v461 = vunpack.c.l.b16 %v361
    %v462 = vunpack.c.l.b16 %v362
    %v463 = vunpack.c.l.b16 %v363
    %v464 = vunpack.c.l.b16 %v364
    %v465 = vunpack.c.l.b16 %v365
    %v466 = vunpack.c.l.b16 %v366
    %v467 = vunpack.c.l.b16 %v367
    %v468 = vunpack.c.l.b16 %v368
    %v469 = vunpack.c.l.b16 %v369
    %v470 = vunpack.c.l.b16 %v370
    %v471 = vunpack.c.l.b16 %v371
    %v472 = vunpack.c.l.b16 %v372
    %v473 = vunpack.c.l.b16 %v373
    %v474 = vpack.c.b16 %v427, %v426
    %v475 = vpack.c.b16 %v429, %v428
    %v476 = vpack.c.b16 %v431, %v430
    %v477 = vpack.c.b16 %v433, %v432
    %v478 = vpack.c.b16 %v435, %v434
    %v479 = vpack.c.b16 %v437, %v436
    %v480 = vpack.c.b16 %v439, %v438
    %v481 = vpack.c.b16 %v441, %v440
    %v482 = vpack.c.b16 %v443, %v442
    %v483 = vpack.c.b16 %v445, %v444
    %v484 = vpack.c.b16 %v447, %v446
    %v485 = vpack.c.b16 %v449, %v448
    %v486 = vpack.c.b16 %v451, %v450
    %v487 = vpack.c.b16 %v453, %v452
    %v488 = vpack.c.b16 %v455, %v454
    %v489 = vpack.c.b16 %v457, %v456
    %v490 = vpack.c.b16 %v459, %v458
    %v491 = vpack.c.b16 %v461, %v460
    %v492 = vpack.c.b16 %v463, %v462
    %v493 = vpack.c.b16 %v465, %v464
    %v494 = vpack.c.b16 %v467, %v466
    %v495 = vpack.c.b16 %v469, %v468
    %v496 = vpack.c.b16 %v471, %v470
    %v497 = vpack.c.b16 %v473, %v472
    %522 = vmatpush.bf16.msra.mxu0 %v481
    %523 = vmatpush.bf16.msra.mxu0 %v480
    %524 = vmatpush.bf16.msra.mxu0 %v479
    %525 = vmatpush.bf16.msra.mxu0 %v478
    %526 = vmatpush.bf16.msra.mxu0 %v477
    %527 = vmatpush.bf16.msra.mxu0 %v476
    %528 = vmatpush.bf16.msra.mxu0 %v475
    %529 = vmatpush.bf16.msra.mxu0 %v474
    %530 = vmatmul.bf16.gmra.mxu0 %v314
    %v531 = vpop.f32.mrf.mxu0
    %v532 = vadd.f32 %v376, %v531
    %v533 = vpop.f32.mrf.mxu0
    %v534 = vadd.f32 %v376, %v533
    %535 = vmatmul.bf16.gmra.mxu0 %v315
    %v536 = vpop.f32.mrf.mxu0
    %v537 = vadd.f32 %v376, %v536
    %v538 = vpop.f32.mrf.mxu0
    %v539 = vadd.f32 %v376, %v538
    %540 = vdwg.mxu0
    %541 = vmatpush.bf16.msra.mxu0 %v489
    %542 = vmatpush.bf16.msra.mxu0 %v488
    %543 = vmatpush.bf16.msra.mxu0 %v487
    %544 = vmatpush.bf16.msra.mxu0 %v486
    %545 = vmatpush.bf16.msra.mxu0 %v485
    %546 = vmatpush.bf16.msra.mxu0 %v484
    %547 = vmatpush.bf16.msra.mxu0 %v483
    %548 = vmatpush.bf16.msra.mxu0 %v482
    %549 = vmatmul.bf16.gmra.mxu0 %v296
    %v550 = vpop.f32.mrf.mxu0
    %v551 = vadd.f32 %v532, %v550
    %v552 = vpop.f32.mrf.mxu0
    %v553 = vadd.f32 %v534, %v552
    %554 = vmatmul.bf16.gmra.mxu0 %v297
    %v555 = vpop.f32.mrf.mxu0
    %v556 = vadd.f32 %v537, %v555
    %v557 = vpop.f32.mrf.mxu0
    %v558 = vadd.f32 %v539, %v557
    %559 = vdwg.mxu0
    %560 = vmatpush.bf16.msra.mxu0 %v497
    %561 = vmatpush.bf16.msra.mxu0 %v496
    %562 = vmatpush.bf16.msra.mxu0 %v495
    %563 = vmatpush.bf16.msra.mxu0 %v494
    %564 = vmatpush.bf16.msra.mxu0 %v493
    %565 = vmatpush.bf16.msra.mxu0 %v492
    %566 = vmatpush.bf16.msra.mxu0 %v491
    %567 = vmatpush.bf16.msra.mxu0 %v490
    %568 = vmatmul.bf16.gmra.mxu0 %v322
    %v569 = vpop.f32.mrf.mxu0
    %v570 = vadd.f32 %v551, %v569
    %v571 = vpop.f32.mrf.mxu0
    %v572 = vadd.f32 %v553, %v571
    %573 = vmatmul.bf16.gmra.mxu0 %v323
    %v574 = vpop.f32.mrf.mxu0
    %v575 = vadd.f32 %v556, %v574
    %v576 = vpop.f32.mrf.mxu0
    %v577 = vadd.f32 %v558, %v576
    %578 = vdwg.mxu0
    %vm579 = vcmp.ge.f32.partialorder %v570, 0.0
    %vm580 = vcmp.ge.f32.partialorder %v572, 0.0
    %vm581 = vcmp.ge.f32.partialorder %v575, 0.0
    %vm582 = vcmp.ge.f32.partialorder %v577, 0.0
    %v583 = vmul.f32 %v570, 0.01
    %v584 = vmul.f32 %v572, 0.01
    %v585 = vmul.f32 %v575, 0.01
    %v586 = vmul.f32 %v577, 0.01
    %v587 = vsel %vm579, %v570, %v583
    %v588 = vsel %vm580, %v572, %v584
    %v589 = vsel %vm581, %v575, %v585
    %v590 = vsel %vm582, %v577, %v586
    %591 = vst [vmem:[#allocation8] sm:$0xff] %v587
    %592 = vst [vmem:[#allocation8 + $0x8] sm:$0xff] %v588
    %593 = vst [vmem:[#allocation8 + $0x10] sm:$0xff] %v589
    %594 = vst [vmem:[#allocation8 + $0x18] sm:$0xff] %v590
    // Predicated region
    $region34: #{tpu_custom_call.1} parent=1 // pred_check
      _
    $region35: #{tpu_custom_call.1} parent=1 // pred_check_branch
      %596 = sbr.rel (0) target = $region37
    $region36: #{tpu_custom_call.1} parent=1 // pred_region
      %598 = vsyncadd [#allocation4], 0
      %s599 = sshll.u32 [#allocation8], 4
      %s600 = int_to_ptr.vmem [resolvable:$true] %s599
      %s601 = sshll.u32 %s5, 4
      %s602 = int_to_ptr.hbm [resolvable:$true] %s601
      %607 = dma.vmem_to_hbm [thread:$0]  %s600, 512, %s602, [#allocation4], 128, 128, 8
    $region37: #{tpu_custom_call.1} parent=1 // pred_fallthru
      _
    // Predicated region
    $region38: #{tpu_custom_call.1} parent=1 // pred_check
      _
    $region39: #{tpu_custom_call.1} parent=1 // pred_check_branch
      %609 = sbr.rel (0) target = $region41
    $region40: #{tpu_custom_call.1} parent=1 // pred_region
      %611 = dma.done [#allocation4], 512
    $region41: #{tpu_custom_call.1} parent=1 // pred_fallthru
      _
    %612 = vsyncpa [#allocation3], 1
    %613 = vsyncpa [#allocation6], 1
    %614 = vsyncpa [#allocation4], 1

</llo_original>
